<compile_context>
chip_gen: v7x
topology: tpu7x:2x2x1
jax: 0.10.0
libtpu: 0.0.40
codegen_flags: <defaults>
</compile_context>

<pallas_src>
import functools

import jax
import jax.numpy as jnp
from jax.experimental import pallas as pl
from jax.experimental.pallas import tpu as pltpu

MEAN = 0.0
STD = 0.1

# ~1 MiB (f32) per block per buffer -> with double-buffered 2 inputs + 1 output
# this is ~6 MiB of VMEM, safe on all of v5e / v6e / v7x.
_BLOCK_ELEMS = 256 * 1024


def _gaussian_noise_kernel(x_ref, noise_ref, o_ref, *, mean, std):
    # out = x + noise * std + mean, computed in the input dtype (bf16 stays bf16).
    o_ref[...] = (x_ref[...] + noise_ref[...] * std + mean).astype(o_ref.dtype)


def _pick_lane_dense_layout(total):
    """Pick (lanes, pad) so the flattened array becomes a lane-dense (rows, lanes) slab."""
    for lanes in (1024, 512, 256, 128):
        if total % lanes == 0:
            return lanes, 0
    lanes = 128
    return lanes, (-total) % lanes


def gaussian_noise_layer(x, key, *, mean=MEAN, std=STD, training=True):
    """Pallas equivalent of GaussianNoiseLayer.forward.

    x:   (N, C, H, W) array (any float dtype).
    key: jax.random key used to draw the Gaussian noise for this call.
         (PyTorch's randn_like advances global RNG state per call; callers must
         pass a fresh key per step/device to keep the regularization effect.)
    """
    if not training:
        return x

    orig_shape = x.shape
    total = x.size
    lanes, pad = _pick_lane_dense_layout(total)

    flat = x.reshape(-1)
    if pad:
        flat = jnp.pad(flat, (0, pad))
    rows = flat.size // lanes
    x2d = flat.reshape(rows, lanes)

    noise_dtype = x.dtype if jnp.issubdtype(x.dtype, jnp.floating) else jnp.float32
    noise2d = jax.random.normal(key, (rows, lanes), dtype=noise_dtype)

    # Row tile: a multiple of 8 (sublane) when it is a partial block, or the
    # full row extent (the (8,128) rule's full-dimension exception).
    block_rows = min(rows, max(8, (_BLOCK_ELEMS // lanes) // 8 * 8))
    grid = (pl.cdiv(rows, block_rows),)

    block_spec = pl.BlockSpec((block_rows, lanes), lambda i: (i, 0))
    kernel = functools.partial(_gaussian_noise_kernel, mean=mean, std=std)

    out2d = pl.pallas_call(
        kernel,
        out_shape=jax.ShapeDtypeStruct((rows, lanes), x.dtype),
        grid=grid,
        in_specs=[block_spec, block_spec],
        out_specs=block_spec,
        compiler_params=pltpu.CompilerParams(
            dimension_semantics=("parallel",),
        ),
    )(x2d, noise2d)

    out_flat = out2d.reshape(-1)
    if pad:
        out_flat = out_flat[:total]
    return out_flat.reshape(orig_shape)


if __name__ == "__main__":
    root_key = jax.random.PRNGKey(0)
    x_key, noise_key = jax.random.split(root_key)

    x = jax.random.normal(x_key, (2, 4, 16, 16), dtype=jnp.float32)

    out = gaussian_noise_layer(x, noise_key, mean=MEAN, std=STD, training=True)
    out = jax.block_until_ready(out)

    # Sanity checks: shape/dtype preserved, noise is present and O(std).
    assert out.shape == x.shape
    assert out.dtype == x.dtype
    diff = out - x
    assert float(jnp.abs(diff).max()) > 0.0          # noise was actually added
    d_std = float(jnp.std(diff))
    assert 0.03 < d_std < 0.3, d_std                 # ~STD, not garbage
    assert abs(float(jnp.mean(diff)) - MEAN) < 0.05  # ~MEAN

    # Eval mode is identity.
    out_eval = jax.block_until_ready(
        gaussian_noise_layer(x, noise_key, training=False)
    )
    assert bool(jnp.all(out_eval == x))

    print("KERNEL_OK")
</pallas_src>

<mosaic_0001>
module attributes {stable_mosaic.version = 11 : i64} {
  func.func @_gaussian_noise_kernel(%arg0: i32, %arg1: memref<2x1024xf32, #tpu.memory_space<vmem>>, %arg2: memref<2x1024xf32, #tpu.memory_space<vmem>>, %arg3: memref<2x1024xf32, #tpu.memory_space<vmem>>) attributes {dimension_semantics = [#tpu.dimension_semantics<parallel>], iteration_bounds = array<i64: 1>, scalar_prefetch = 0 : i64, scratch_operands = 0 : i64, tpu.core_type = #tpu.core_type<tc>, window_params = [{transform_indices = @transform_0, window_bounds = array<i64: 2, 1024>}, {transform_indices = @transform_1, window_bounds = array<i64: 2, 1024>}, {transform_indices = @transform_2, window_bounds = array<i64: 2, 1024>}]} {
    %c0 = arith.constant 0 : index
    %c0_0 = arith.constant 0 : index
    %0 = vector.load %arg1[%c0, %c0_0] : memref<2x1024xf32, #tpu.memory_space<vmem>>, vector<2x1024xf32>
    %c0_1 = arith.constant 0 : index
    %c0_2 = arith.constant 0 : index
    %1 = vector.load %arg2[%c0_1, %c0_2] : memref<2x1024xf32, #tpu.memory_space<vmem>>, vector<2x1024xf32>
    %cst = arith.constant 1.000000e-01 : f32
    %2 = vector.broadcast %cst : f32 to vector<2x1024xf32>
    %3 = arith.mulf %1, %2 : vector<2x1024xf32>
    %4 = arith.addf %0, %3 : vector<2x1024xf32>
    %cst_3 = arith.constant 0.000000e+00 : f32
    %5 = vector.broadcast %cst_3 : f32 to vector<2x1024xf32>
    %6 = arith.addf %4, %5 : vector<2x1024xf32>
    %c0_4 = arith.constant 0 : index
    %c0_5 = arith.constant 0 : index
    %7 = vector.load %arg3[%c0_4, %c0_5] : memref<2x1024xf32, #tpu.memory_space<vmem>>, vector<2x1024xf32>
    tpu.vector_store %arg3[%c0_4, %c0_5], %6 {strides = array<i32>} : memref<2x1024xf32, #tpu.memory_space<vmem>>, vector<2x1024xf32>,
    return
  }
  func.func @transform_0(%arg0: i32) -> (i32, i32) {
    %c0_i32 = arith.constant 0 : i32
    %c0_i32_0 = arith.constant 0 : i32
    return %arg0, %c0_i32 : i32, i32
  }
  func.func @transform_1(%arg0: i32) -> (i32, i32) {
    %c0_i32 = arith.constant 0 : i32
    %c0_i32_0 = arith.constant 0 : i32
    return %arg0, %c0_i32 : i32, i32
  }
  func.func @transform_2(%arg0: i32) -> (i32, i32) {
    %c0_i32 = arith.constant 0 : i32
    %c0_i32_0 = arith.constant 0 : i32
    return %arg0, %c0_i32 : i32, i32
  }
}

</mosaic_0001>

<llo_original>
// kernel: tpu_custom_call.1
$region0: #{tpu_custom_call.1}
  #allocation0 [shape = 'u32[]', space=smem, size = 0x4, offset = 0x4, fixed_abs, tag = 'smem constant byte address 0x4 - core index']
  #allocation1 [shape = 'u32[144,128]{1,0:T(1,128)}', space=vmem, size = 0x12000, scoped, tag = 'internal scratch']
  %s0 = inlined_call_operand.hbm [shape: f32[2,1024], index: 0, kind: input, shape index: {}]
  %s1 = inlined_call_operand.hbm [shape: f32[2,1024], index: 1, kind: input, shape index: {}]
  %s2 = inlined_call_operand.hbm [shape: f32[2,1024], index: 2, kind: output, shape index: {}]
  %s3 = sld [smem:[#allocation0]]
  $region26: #{tpu_custom_call.1} parent=0
    _
  %s5 = ssub.s32 1, %s3
  %s6 = scalar_select 0, %s5, %s3
  $region1: #{tpu_custom_call.1} parent=0
    #allocation2 [shape = 'u8[8192]{0}', space=vmem, size = 0x2000, scoped, tag = 'input window, operand 0, single buffered']
    #allocation3 [shape = 's32[1]{0}', space=sflag, size = 0x4, scoped, tag = 'scoped memory for tpu_custom_call.1']
    #allocation4 [shape = 's32[1]{0}', space=sflag, size = 0x4, scoped, tag = 'scoped memory for tpu_custom_call.1']
    #allocation5 [shape = 'u8[8192]{0}', space=vmem, size = 0x2000, scoped, tag = 'input window, operand 1, single buffered']
    #allocation6 [shape = 's32[1]{0}', space=sflag, size = 0x4, scoped, tag = 'scoped memory for tpu_custom_call.1']
    #allocation7 [shape = 'u8[8192]{0}', space=vmem, size = 0x2000, scoped, tag = 'output window, operand 0, single buffered']
    %7 = vsyncpa [#allocation3], 0
    %8 = vsyncpa [#allocation6], 0
    %9 = vsyncpa [#allocation4], 0
    // Predicated region
    $region2: #{tpu_custom_call.1} parent=1 // pred_check
      _
    $region3: #{tpu_custom_call.1} parent=1 // pred_check_branch
      %11 = sbr.rel (0) target = $region5
    $region4: #{tpu_custom_call.1} parent=1 // pred_region
      %s13 = ssub.s32 256, 256
      %14 = vsyncadd [#allocation3], %s13
      %s16 = sshll.u32 [#allocation2], 4
      %s17 = int_to_ptr.vmem [resolvable:$true] %s16
      %19 = dma.hbm_to_vmem [thread:$0]  %s0, 256, %s17, [#allocation3]
    $region5: #{tpu_custom_call.1} parent=1 // pred_fallthru
      _
    // Predicated region
    $region6: #{tpu_custom_call.1} parent=1 // pred_check
      _
    $region7: #{tpu_custom_call.1} parent=1 // pred_check_branch
      %21 = sbr.rel (0) target = $region9
    $region8: #{tpu_custom_call.1} parent=1 // pred_region
      %s23 = ssub.s32 256, 256
      %24 = vsyncadd [#allocation6], %s23
      %s26 = sshll.u32 [#allocation5], 4
      %s27 = int_to_ptr.vmem [resolvable:$true] %s26
      %29 = dma.hbm_to_vmem [thread:$0]  %s1, 256, %s27, [#allocation6]
    $region9: #{tpu_custom_call.1} parent=1 // pred_fallthru
      _
    // Predicated region
    $region10: #{tpu_custom_call.1} parent=1 // pred_check
      _
    $region11: #{tpu_custom_call.1} parent=1 // pred_check_branch
      %31 = sbr.rel (0) target = $region13
    $region12: #{tpu_custom_call.1} parent=1 // pred_region
      %32 = dma.done [#allocation3], 256
    $region13: #{tpu_custom_call.1} parent=1 // pred_fallthru
      _
    // Predicated region
    $region14: #{tpu_custom_call.1} parent=1 // pred_check
      _
    $region15: #{tpu_custom_call.1} parent=1 // pred_check_branch
      %34 = sbr.rel (0) target = $region17
    $region16: #{tpu_custom_call.1} parent=1 // pred_region
      %35 = dma.done [#allocation6], 256
    $region17: #{tpu_custom_call.1} parent=1 // pred_fallthru
      _
    %v36 = vld [vmem:[#allocation2] sm:$0xff]
    %v37 = vld [vmem:[#allocation2 + $0x8] sm:$0xff]
    %v38 = vld [vmem:[#allocation5] sm:$0xff]
    %v39 = vld [vmem:[#allocation5 + $0x8] sm:$0xff]
    %v40 = vmul.f32 %v38, 0.1
    %v41 = vmul.f32 %v39, 0.1
    %v42 = vadd.f32 %v36, %v40
    %v43 = vadd.f32 %v37, %v41
    %v44 = vadd.f32 %v42, 0.0
    %v45 = vadd.f32 %v43, 0.0
    %46 = vst [vmem:[#allocation7] sm:$0xff] %v44
    %47 = vst [vmem:[#allocation7 + $0x8] sm:$0xff] %v45
    // Predicated region
    $region18: #{tpu_custom_call.1} parent=1 // pred_check
      _
    $region19: #{tpu_custom_call.1} parent=1 // pred_check_branch
      %49 = sbr.rel (0) target = $region21
    $region20: #{tpu_custom_call.1} parent=1 // pred_region
      %s51 = ssub.s32 256, 256
      %52 = vsyncadd [#allocation4], %s51
      %s54 = sshll.u32 [#allocation7], 4
      %s55 = int_to_ptr.vmem [resolvable:$true] %s54
      %57 = dma.vmem_to_hbm [thread:$0]  %s55, 256, %s2, [#allocation4]
    $region21: #{tpu_custom_call.1} parent=1 // pred_fallthru
      _
    // Predicated region
    $region22: #{tpu_custom_call.1} parent=1 // pred_check
      _
    $region23: #{tpu_custom_call.1} parent=1 // pred_check_branch
      %59 = sbr.rel (0) target = $region25
    $region24: #{tpu_custom_call.1} parent=1 // pred_region
      %60 = dma.done [#allocation4], 256
    $region25: #{tpu_custom_call.1} parent=1 // pred_fallthru
      _
    %61 = vsyncpa [#allocation3], 1
    %62 = vsyncpa [#allocation6], 1
    %63 = vsyncpa [#allocation4], 1

</llo_original>
